<compile_context>
chip_gen: v7x
topology: tpu7x:2x2x1
jax: 0.10.0
libtpu: 0.0.40
codegen_flags: <defaults>
</compile_context>

<pallas_src>
import jax
import jax.numpy as jnp
import numpy as np
from jax.experimental import pallas as pl
from jax.experimental.pallas import tpu as pltpu


_LANE = 128            # lane width (last-dim tiling unit)
_SUBLANE_BF16 = 16     # bf16 sublane packing (rows per vreg)
_MAX_TILE_M = 512      # cap on batch tile
_VMEM_BUDGET = 24 * 1024 * 1024   # double-buffered working-set budget (v7x-safe)


def _round_up(x, m):
    return (x + m - 1) // m * m


def _linear_kernel(x_ref, w_ref, b_ref, o_ref):
    # MXU matmul on bf16 tiles with f32 accumulation, then f32 bias add.
    acc = jnp.dot(x_ref[...], w_ref[...], preferred_element_type=jnp.float32)
    o_ref[...] = (acc + b_ref[...]).astype(o_ref.dtype)


def prepare_head_params(w_t, b):
    """One-time parameter preparation (call at init, NOT per forward).

    w_t: [H, L] float32 (transposed torch nn.Linear weight)
    b:   [L]    float32
    Returns (w_bf16 [H, Lp], b_f32 [1, Lp], L) with Lp = round_up(L, 128).
    """
    H, L = w_t.shape
    Lp = _round_up(max(L, _LANE), _LANE)
    wp = w_t if Lp == L else jnp.pad(w_t, ((0, 0), (0, Lp - L)))
    bp = b if Lp == L else jnp.pad(b, (0, Lp - L))
    w_bf16 = wp.astype(jnp.bfloat16)
    b_f32 = bp.reshape(1, Lp).astype(jnp.float32)
    return w_bf16, b_f32, L


def multilabel_text_classification_head_forward(
    x, w_bf16, b_f32, num_labels, *, max_block_labels=None
):
    """Forward pass: logits = x @ W^T + b  (single nn.Linear).

    x:       [B, H] float32 (per-sequence embeddings)
    w_bf16:  [H, Lp] bfloat16 (pre-padded, pre-cast; from prepare_head_params)
    b_f32:   [1, Lp] float32  (pre-padded)
    Returns logits [B, num_labels] float32.
    """
    B, H = x.shape
    Hw, Lp = w_bf16.shape
    assert Hw == H and Lp % _LANE == 0
    L = num_labels

    # --- batch tiling: pad only to the bf16 sublane unit (16 rows) ---
    Bp = _round_up(max(B, _SUBLANE_BF16), _SUBLANE_BF16)
    if Bp <= _MAX_TILE_M:
        tm = Bp
    else:
        tm = _SUBLANE_BF16
        for cand in range(_MAX_TILE_M, 0, -_SUBLANE_BF16):
            if Bp % cand == 0:
                tm = cand
                break

    # --- label tiling: full Lp if the double-buffered working set fits ---
    def working_set(tn):
        # 2 buffers x (x tile bf16 + W tile bf16 + out tile f32 + bias f32)
        return 2 * (tm * H * 2 + H * tn * 2 + tm * tn * 4 + tn * 4)

    tn_cap = Lp if max_block_labels is None else min(
        Lp, _round_up(max_block_labels, _LANE))
    tn = _LANE
    for d in range(1, Lp // _LANE + 1):
        if Lp % d:
            continue
        cand = Lp // d
        if cand % _LANE:
            continue
        if cand <= tn_cap and working_set(cand) <= _VMEM_BUDGET:
            tn = cand
            break

    # Activation pad + cast (small; weight was prepared once at init).
    xp = x if Bp == B else jnp.pad(x, ((0, Bp - B), (0, 0)))
    xb = xp.astype(jnp.bfloat16)

    # Labels OUTER, batch INNER (fast) so the (H, tn) weight block index is
    # constant across consecutive grid steps and never re-fetched.
    grid = (Lp // tn, Bp // tm)

    cost = pl.CostEstimate(
        flops=2 * Bp * H * Lp,
        transcendentals=0,
        bytes_accessed=(Bp * H * 2) + (H * Lp * 2) + (Lp * 4) + (Bp * Lp * 4),
    )

    out = pl.pallas_call(
        _linear_kernel,
        out_shape=jax.ShapeDtypeStruct((Bp, Lp), jnp.float32),
        grid_spec=pl.GridSpec(
            grid=grid,
            in_specs=[
                pl.BlockSpec((tm, H), lambda j, i: (i, 0)),   # x tile
                pl.BlockSpec((H, tn), lambda j, i: (0, j)),   # weight tile
                pl.BlockSpec((1, tn), lambda j, i: (0, j)),   # bias tile
            ],
            out_specs=pl.BlockSpec((tm, tn), lambda j, i: (i, j)),
        ),
        compiler_params=pltpu.CompilerParams(
            dimension_semantics=("parallel", "parallel"),
            # Working set is capped at ~24 MiB above, so 32 MiB scoped VMEM is
            # safe on v5e/v6e (128 MiB) and v7x (64 MiB).
            vmem_limit_bytes=32 * 1024 * 1024,
        ),
        cost_estimate=cost,
    )(xb, w_bf16, b_f32)

    return out[:B, :L]


def _reference_f32(x, w_t, b):
    # f32 reference (matches PyTorch nn.Linear math).
    return jnp.dot(x, w_t) + b


if __name__ == "__main__":
    key = jax.random.PRNGKey(0)

    def make_case(k, batch, hidden, num_labels):
        kx, kw, kb = jax.random.split(k, 3)
        bound = 1.0 / np.sqrt(hidden)
        # torch Linear weight is [num_labels, hidden]; we store its transpose.
        w_torch = jax.random.uniform(
            kw, (num_labels, hidden), jnp.float32, -bound, bound)
        b = jax.random.uniform(kb, (num_labels,), jnp.float32, -bound, bound)
        x = jax.random.normal(kx, (batch, hidden), jnp.float32)
        return x, w_torch.T, b

    def check(x, w_t, b, **fwd_kwargs):
        w_bf16, b_f32, L = prepare_head_params(w_t, b)   # one-time param prep
        logits = multilabel_text_classification_head_forward(
            x, w_bf16, b_f32, L, **fwd_kwargs)
        logits = jax.block_until_ready(logits)
        ref = _reference_f32(x, w_t, b)
        assert logits.shape == (x.shape[0], L)
        # Explicit tolerance decision: bf16 operands + f32 accumulation vs f32.
        assert np.allclose(np.asarray(logits), np.asarray(ref),
                           atol=2e-2, rtol=2e-2)

    k1, k2, k3 = jax.random.split(key, 3)

    # Case 1: module-default shapes (layer_dims=[768, num_labels]), tiny batch.
    x, w_t, b = make_case(k1, batch=8, hidden=768, num_labels=9)
    check(x, w_t, b)

    # Case 2: padding paths (B=160 stays 160, L=200 -> Lp=256), single tile.
    x2, w_t2, b2 = make_case(k2, batch=160, hidden=768, num_labels=200)
    check(x2, w_t2, b2)

    # Case 3: forced label-tiled grid (labels outer, batch inner) with >=2
    # parallel blocks (exercises megacore sharding path on v7x).
    x3, w_t3, b3 = make_case(k3, batch=40, hidden=768, num_labels=300)
    check(x3, w_t3, b3, max_block_labels=128)

    print("KERNEL_OK")
</pallas_src>

<mosaic_0001>
module attributes {stable_mosaic.version = 11 : i64} {
  func.func @_linear_kernel(%arg0: i32, %arg1: i32, %arg2: memref<16x768xbf16, #tpu.memory_space<vmem>>, %arg3: memref<768x128xbf16, #tpu.memory_space<vmem>>, %arg4: memref<1x128xf32, #tpu.memory_space<vmem>>, %arg5: memref<16x128xf32, #tpu.memory_space<vmem>>) attributes {dimension_semantics = [#tpu.dimension_semantics<parallel>, #tpu.dimension_semantics<parallel>], iteration_bounds = array<i64: 1, 1>, scalar_prefetch = 0 : i64, scratch_operands = 0 : i64, tpu.core_type = #tpu.core_type<tc>, window_params = [{transform_indices = @transform_0, window_bounds = array<i64: 16, 768>}, {transform_indices = @transform_1, window_bounds = array<i64: 768, 128>}, {transform_indices = @transform_2, window_bounds = array<i64: 1, 128>}, {transform_indices = @transform_3, window_bounds = array<i64: 16, 128>}]} {
    %c0 = arith.constant 0 : index
    %c0_0 = arith.constant 0 : index
    %0 = vector.load %arg2[%c0, %c0_0] : memref<16x768xbf16, #tpu.memory_space<vmem>>, vector<16x768xbf16>
    %c0_1 = arith.constant 0 : index
    %c0_2 = arith.constant 0 : index
    %1 = vector.load %arg3[%c0_1, %c0_2] : memref<768x128xbf16, #tpu.memory_space<vmem>>, vector<768x128xbf16>
    %cst = arith.constant dense<0.000000e+00> : vector<16x128xf32>
    %2 = tpu.matmul %0, %1, %cst {dimension_numbers = #tpu.dot_dimension_numbers<[1], [0], [0], [1], [0, 0, 1, 1], [], []>} : vector<16x768xbf16>, vector<768x128xbf16>, vector<16x128xf32> -> vector<16x128xf32>
    %c0_3 = arith.constant 0 : index
    %c0_4 = arith.constant 0 : index
    %3 = vector.load %arg4[%c0_3, %c0_4] : memref<1x128xf32, #tpu.memory_space<vmem>>, vector<1x128xf32>
    %4 = vector.broadcast %3 : vector<1x128xf32> to vector<16x128xf32>
    %5 = arith.addf %2, %4 : vector<16x128xf32>
    %c0_5 = arith.constant 0 : index
    %c0_6 = arith.constant 0 : index
    %6 = vector.load %arg5[%c0_5, %c0_6] : memref<16x128xf32, #tpu.memory_space<vmem>>, vector<16x128xf32>
    tpu.vector_store %arg5[%c0_5, %c0_6], %5 {strides = array<i32>} : memref<16x128xf32, #tpu.memory_space<vmem>>, vector<16x128xf32>,
    return
  }
  func.func @transform_0(%arg0: i32, %arg1: i32) -> (i32, i32) {
    %c0_i32 = arith.constant 0 : i32
    %c0_i32_0 = arith.constant 0 : i32
    return %arg1, %c0_i32 : i32, i32
  }
  func.func @transform_1(%arg0: i32, %arg1: i32) -> (i32, i32) {
    %c0_i32 = arith.constant 0 : i32
    %c0_i32_0 = arith.constant 0 : i32
    return %c0_i32, %arg0 : i32, i32
  }
  func.func @transform_2(%arg0: i32, %arg1: i32) -> (i32, i32) {
    %c0_i32 = arith.constant 0 : i32
    %c0_i32_0 = arith.constant 0 : i32
    return %c0_i32, %arg0 : i32, i32
  }
  func.func @transform_3(%arg0: i32, %arg1: i32) -> (i32, i32) {
    %c0_i32 = arith.constant 0 : i32
    return %arg1, %arg0 : i32, i32
  }
}

</mosaic_0001>

<llo_original>
// kernel: tpu_custom_call.1
$region0: #{tpu_custom_call.1}
  #allocation0 [shape = 'u32[]', space=smem, size = 0x4, offset = 0x4, fixed_abs, tag = 'smem constant byte address 0x4 - core index']
  #allocation1 [shape = 'u32[144,128]{1,0:T(1,128)}', space=vmem, size = 0x12000, scoped, tag = 'internal scratch']
  %s0 = inlined_call_operand.hbm [shape: bf16[16,768], index: 0, kind: input, shape index: {}]
  %s1 = inlined_call_operand.hbm [shape: bf16[768,128], index: 1, kind: input, shape index: {}]
  %s2 = inlined_call_operand.vmem [shape: f32[1,128], index: 2, kind: input, shape index: {}]
  %s3 = inlined_call_operand.hbm [shape: f32[16,128], index: 3, kind: output, shape index: {}]
  %s4 = sld [smem:[#allocation0]]
  $region30: #{tpu_custom_call.1} parent=0
    _
  %s6 = ssub.s32 1, %s4
  %s7 = scalar_select 0, %s6, %s4
  $region1: #{tpu_custom_call.1} parent=0
    #allocation2 [shape = 'u8[24576]{0}', space=vmem, size = 0x6000, scoped, tag = 'input window, operand 0, single buffered']
    #allocation3 [shape = 's32[1]{0}', space=sflag, size = 0x4, scoped, tag = 'scoped memory for tpu_custom_call.1']
    #allocation4 [shape = 's32[1]{0}', space=sflag, size = 0x4, scoped, tag = 'scoped memory for tpu_custom_call.1']
    #allocation5 [shape = 'u8[196608]{0}', space=vmem, size = 0x30000, scoped, tag = 'input window, operand 1, single buffered']
    #allocation6 [shape = 's32[1]{0}', space=sflag, size = 0x4, scoped, tag = 'scoped memory for tpu_custom_call.1']
    #allocation7 [shape = 'u8[8192]{0}', space=vmem, size = 0x2000, scoped, tag = 'output window, operand 0, single buffered']
    %8 = vsyncpa [#allocation3], 0
    %9 = vsyncpa [#allocation6], 0
    %10 = vsyncpa [#allocation4], 0
    // Predicated region
    $region2: #{tpu_custom_call.1} parent=1 // pred_check
      _
    $region3: #{tpu_custom_call.1} parent=1 // pred_check_branch
      %12 = sbr.rel (0) target = $region5
    $region4: #{tpu_custom_call.1} parent=1 // pred_region
      %s14 = ssub.s32 768, 768
      %15 = vsyncadd [#allocation3], %s14
      %s16 = sshll.u32 [#allocation2], 4
      %s17 = int_to_ptr.vmem [resolvable:$true] %s16
      %22 = dma.hbm_to_vmem [thread:$0]  %s0, 768, %s17, [#allocation3], 384, 384, 24
    $region5: #{tpu_custom_call.1} parent=1 // pred_fallthru
      _
    // Predicated region
    $region6: #{tpu_custom_call.1} parent=1 // pred_check
      _
    $region7: #{tpu_custom_call.1} parent=1 // pred_check_branch
      %24 = sbr.rel (0) target = $region9
    $region8: #{tpu_custom_call.1} parent=1 // pred_region
      %s26 = ssub.s32 6144, 6144
      %27 = vsyncadd [#allocation6], %s26
      %s28 = sshll.u32 [#allocation5], 4
      %s29 = int_to_ptr.vmem [resolvable:$true] %s28
      %34 = dma.hbm_to_vmem [thread:$0]  %s1, 6144, %s29, [#allocation6], 64, 64, 4
    $region9: #{tpu_custom_call.1} parent=1 // pred_fallthru
      _
    // Predicated region
    $region10: #{tpu_custom_call.1} parent=1 // pred_check
      _
    $region11: #{tpu_custom_call.1} parent=1 // pred_check_branch
      %36 = sbr.rel (0) target = $region13
    $region12: #{tpu_custom_call.1} parent=1 // pred_region
      _
    $region13: #{tpu_custom_call.1} parent=1 // pred_fallthru
      _
    // Predicated region
    $region14: #{tpu_custom_call.1} parent=1 // pred_check
      _
    $region15: #{tpu_custom_call.1} parent=1 // pred_check_branch
      %38 = sbr.rel (0) target = $region17
    $region16: #{tpu_custom_call.1} parent=1 // pred_region
      %39 = dma.done [#allocation3], 768
    $region17: #{tpu_custom_call.1} parent=1 // pred_fallthru
      _
    // Predicated region
    $region18: #{tpu_custom_call.1} parent=1 // pred_check
      _
    $region19: #{tpu_custom_call.1} parent=1 // pred_check_branch
      %41 = sbr.rel (0) target = $region21
    $region20: #{tpu_custom_call.1} parent=1 // pred_region
      %42 = dma.done [#allocation6], 6144
    $region21: #{tpu_custom_call.1} parent=1 // pred_fallthru
      _
    %v44 = vld [vmem:[#allocation2] sm:$0xff]
    %v45 = vld [vmem:[#allocation2 + $0x8] sm:$0xff]
    %v46 = vld [vmem:[#allocation2 + $0x10] sm:$0xff]
    %v47 = vld [vmem:[#allocation2 + $0x18] sm:$0xff]
    %v48 = vld [vmem:[#allocation2 + $0x20] sm:$0xff]
    %v49 = vld [vmem:[#allocation2 + $0x28] sm:$0xff]
    %v50 = vld [vmem:[#allocation5] sm:$0xf]
    %v51 = vld [vmem:[#allocation5 + $0x4] sm:$0xf]
    %v52 = vld [vmem:[#allocation5 + $0x8] sm:$0xf]
    %v53 = vld [vmem:[#allocation5 + $0xc] sm:$0xf]
    %v54 = vld [vmem:[#allocation5 + $0x10] sm:$0xf]
    %v55 = vld [vmem:[#allocation5 + $0x14] sm:$0xf]
    %v56 = vld [vmem:[#allocation5 + $0x18] sm:$0xf]
    %v57 = vld [vmem:[#allocation5 + $0x1c] sm:$0xf]
    %v58 = vld [vmem:[#allocation5 + $0x20] sm:$0xf]
    %v59 = vld [vmem:[#allocation5 + $0x24] sm:$0xf]
    %v60 = vld [vmem:[#allocation5 + $0x28] sm:$0xf]
    %v61 = vld [vmem:[#allocation5 + $0x2c] sm:$0xf]
    %v62 = vld [vmem:[#allocation5 + $0x30] sm:$0xf]
    %v63 = vld [vmem:[#allocation5 + $0x34] sm:$0xf]
    %v64 = vld [vmem:[#allocation5 + $0x38] sm:$0xf]
    %v65 = vld [vmem:[#allocation5 + $0x3c] sm:$0xf]
    %v66 = vld [vmem:[#allocation5 + $0x40] sm:$0xf]
    %v67 = vld [vmem:[#allocation5 + $0x44] sm:$0xf]
    %v68 = vld [vmem:[#allocation5 + $0x48] sm:$0xf]
    %v69 = vld [vmem:[#allocation5 + $0x4c] sm:$0xf]
    %v70 = vld [vmem:[#allocation5 + $0x50] sm:$0xf]
    %v71 = vld [vmem:[#allocation5 + $0x54] sm:$0xf]
    %v72 = vld [vmem:[#allocation5 + $0x58] sm:$0xf]
    %v73 = vld [vmem:[#allocation5 + $0x5c] sm:$0xf]
    %v74 = vld [vmem:[#allocation5 + $0x60] sm:$0xf]
    %v75 = vld [vmem:[#allocation5 + $0x64] sm:$0xf]
    %v76 = vld [vmem:[#allocation5 + $0x68] sm:$0xf]
    %v77 = vld [vmem:[#allocation5 + $0x6c] sm:$0xf]
    %v78 = vld [vmem:[#allocation5 + $0x70] sm:$0xf]
    %v79 = vld [vmem:[#allocation5 + $0x74] sm:$0xf]
    %v80 = vld [vmem:[#allocation5 + $0x78] sm:$0xf]
    %v81 = vld [vmem:[#allocation5 + $0x7c] sm:$0xf]
    %v82 = vld [vmem:[#allocation5 + $0x80] sm:$0xf]
    %v83 = vld [vmem:[#allocation5 + $0x84] sm:$0xf]
    %v84 = vld [vmem:[#allocation5 + $0x88] sm:$0xf]
    %v85 = vld [vmem:[#allocation5 + $0x8c] sm:$0xf]
    %v86 = vld [vmem:[#allocation5 + $0x90] sm:$0xf]
    %v87 = vld [vmem:[#allocation5 + $0x94] sm:$0xf]
    %v88 = vld [vmem:[#allocation5 + $0x98] sm:$0xf]
    %v89 = vld [vmem:[#allocation5 + $0x9c] sm:$0xf]
    %v90 = vld [vmem:[#allocation5 + $0xa0] sm:$0xf]
    %v91 = vld [vmem:[#allocation5 + $0xa4] sm:$0xf]
    %v92 = vld [vmem:[#allocation5 + $0xa8] sm:$0xf]
    %v93 = vld [vmem:[#allocation5 + $0xac] sm:$0xf]
    %v94 = vld [vmem:[#allocation5 + $0xb0] sm:$0xf]
    %v95 = vld [vmem:[#allocation5 + $0xb4] sm:$0xf]
    %v96 = vld [vmem:[#allocation5 + $0xb8] sm:$0xf]
    %v97 = vld [vmem:[#allocation5 + $0xbc] sm:$0xf]
    %v98 = vld [vmem:[#allocation5 + $0xc0] sm:$0xf]
    %v99 = vld [vmem:[#allocation5 + $0xc4] sm:$0xf]
    %v100 = vld [vmem:[#allocation5 + $0xc8] sm:$0xf]
    %v101 = vld [vmem:[#allocation5 + $0xcc] sm:$0xf]
    %v102 = vld [vmem:[#allocation5 + $0xd0] sm:$0xf]
    %v103 = vld [vmem:[#allocation5 + $0xd4] sm:$0xf]
    %v104 = vld [vmem:[#allocation5 + $0xd8] sm:$0xf]
    %v105 = vld [vmem:[#allocation5 + $0xdc] sm:$0xf]
    %v106 = vld [vmem:[#allocation5 + $0xe0] sm:$0xf]
    %v107 = vld [vmem:[#allocation5 + $0xe4] sm:$0xf]
    %v108 = vld [vmem:[#allocation5 + $0xe8] sm:$0xf]
    %v109 = vld [vmem:[#allocation5 + $0xec] sm:$0xf]
    %v110 = vld [vmem:[#allocation5 + $0xf0] sm:$0xf]
    %v111 = vld [vmem:[#allocation5 + $0xf4] sm:$0xf]
    %v112 = vld [vmem:[#allocation5 + $0xf8] sm:$0xf]
    %v113 = vld [vmem:[#allocation5 + $0xfc] sm:$0xf]
    %v114 = vld [vmem:[#allocation5 + $0x100] sm:$0xf]
    %v115 = vld [vmem:[#allocation5 + $0x104] sm:$0xf]
    %v116 = vld [vmem:[#allocation5 + $0x108] sm:$0xf]
    %v117 = vld [vmem:[#allocation5 + $0x10c] sm:$0xf]
    %v118 = vld [vmem:[#allocation5 + $0x110] sm:$0xf]
    %v119 = vld [vmem:[#allocation5 + $0x114] sm:$0xf]
    %v120 = vld [vmem:[#allocation5 + $0x118] sm:$0xf]
    %v121 = vld [vmem:[#allocation5 + $0x11c] sm:$0xf]
    %v122 = vld [vmem:[#allocation5 + $0x120] sm:$0xf]
    %v123 = vld [vmem:[#allocation5 + $0x124] sm:$0xf]
    %v124 = vld [vmem:[#allocation5 + $0x128] sm:$0xf]
    %v125 = vld [vmem:[#allocation5 + $0x12c] sm:$0xf]
    %v126 = vld [vmem:[#allocation5 + $0x130] sm:$0xf]
    %v127 = vld [vmem:[#allocation5 + $0x134] sm:$0xf]
    %v128 = vld [vmem:[#allocation5 + $0x138] sm:$0xf]
    %v129 = vld [vmem:[#allocation5 + $0x13c] sm:$0xf]
    %v130 = vld [vmem:[#allocation5 + $0x140] sm:$0xf]
    %v131 = vld [vmem:[#allocation5 + $0x144] sm:$0xf]
    %v132 = vld [vmem:[#allocation5 + $0x148] sm:$0xf]
    %v133 = vld [vmem:[#allocation5 + $0x14c] sm:$0xf]
    %v134 = vld [vmem:[#allocation5 + $0x150] sm:$0xf]
    %v135 = vld [vmem:[#allocation5 + $0x154] sm:$0xf]
    %v136 = vld [vmem:[#allocation5 + $0x158] sm:$0xf]
    %v137 = vld [vmem:[#allocation5 + $0x15c] sm:$0xf]
    %v138 = vld [vmem:[#allocation5 + $0x160] sm:$0xf]
    %v139 = vld [vmem:[#allocation5 + $0x164] sm:$0xf]
    %v140 = vld [vmem:[#allocation5 + $0x168] sm:$0xf]
    %v141 = vld [vmem:[#allocation5 + $0x16c] sm:$0xf]
    %v142 = vld [vmem:[#allocation5 + $0x170] sm:$0xf]
    %v143 = vld [vmem:[#allocation5 + $0x174] sm:$0xf]
    %v144 = vld [vmem:[#allocation5 + $0x178] sm:$0xf]
    %v145 = vld [vmem:[#allocation5 + $0x17c] sm:$0xf]
    %v146 = vld [vmem:[%s2] sm:$0x1]
    %v148 = vlaneseq
    %v149 = vshrl.u32 %v148, 7
    %v150 = vsub.s32 0, %v149
    %v151 = vrot.slane %v146, %v150
    %v159 = vunpack.c.l.b16 %v44
    %v160 = vunpack.c.h.b16 %v44
    %v161 = vunpack.c.l.b16 %v45
    %v162 = vunpack.c.h.b16 %v45
    %v163 = vunpack.c.l.b16 %v46
    %v164 = vunpack.c.h.b16 %v46
    %v165 = vunpack.c.l.b16 %v47
    %v166 = vunpack.c.h.b16 %v47
    %v167 = vunpack.c.l.b16 %v48
    %v168 = vunpack.c.h.b16 %v48
    %v169 = vunpack.c.l.b16 %v49
    %v170 = vunpack.c.h.b16 %v49
    %v171 = vpack.c.b16 %v165, %v159
    %v172 = vpack.c.b16 %v166, %v160
    %v173 = vpack.c.b16 %v167, %v161
    %v174 = vpack.c.b16 %v168, %v162
    %v175 = vpack.c.b16 %v169, %v163
    %v176 = vpack.c.b16 %v170, %v164
    %v279 = vunpack.c.l.b16 %v50
    %v280 = vunpack.c.l.b16 %v51
    %v281 = vunpack.c.l.b16 %v52
    %v282 = vunpack.c.l.b16 %v53
    %v283 = vunpack.c.l.b16 %v54
    %v284 = vunpack.c.l.b16 %v55
    %v285 = vunpack.c.l.b16 %v56
    %v286 = vunpack.c.l.b16 %v57
    %v287 = vunpack.c.l.b16 %v58
    %v288 = vunpack.c.l.b16 %v59
    %v289 = vunpack.c.l.b16 %v60
    %v290 = vunpack.c.l.b16 %v61
    %v291 = vunpack.c.l.b16 %v62
    %v292 = vunpack.c.l.b16 %v63
    %v293 = vunpack.c.l.b16 %v64
    %v294 = vunpack.c.l.b16 %v65
    %v295 = vunpack.c.l.b16 %v66
    %v296 = vunpack.c.l.b16 %v67
    %v297 = vunpack.c.l.b16 %v68
    %v298 = vunpack.c.l.b16 %v69
    %v299 = vunpack.c.l.b16 %v70
    %v300 = vunpack.c.l.b16 %v71
    %v301 = vunpack.c.l.b16 %v72
    %v302 = vunpack.c.l.b16 %v73
    %v303 = vunpack.c.l.b16 %v74
    %v304 = vunpack.c.l.b16 %v75
    %v305 = vunpack.c.l.b16 %v76
    %v306 = vunpack.c.l.b16 %v77
    %v307 = vunpack.c.l.b16 %v78
    %v308 = vunpack.c.l.b16 %v79
    %v309 = vunpack.c.l.b16 %v80
    %v310 = vunpack.c.l.b16 %v81
    %v311 = vunpack.c.l.b16 %v82
    %v312 = vunpack.c.l.b16 %v83
    %v313 = vunpack.c.l.b16 %v84
    %v314 = vunpack.c.l.b16 %v85
    %v315 = vunpack.c.l.b16 %v86
    %v316 = vunpack.c.l.b16 %v87
    %v317 = vunpack.c.l.b16 %v88
    %v318 = vunpack.c.l.b16 %v89
    %v319 = vunpack.c.l.b16 %v90
    %v320 = vunpack.c.l.b16 %v91
    %v321 = vunpack.c.l.b16 %v92
    %v322 = vunpack.c.l.b16 %v93
    %v323 = vunpack.c.l.b16 %v94
    %v324 = vunpack.c.l.b16 %v95
    %v325 = vunpack.c.l.b16 %v96
    %v326 = vunpack.c.l.b16 %v97
    %v327 = vunpack.c.l.b16 %v98
    %v328 = vunpack.c.l.b16 %v99
    %v329 = vunpack.c.l.b16 %v100
    %v330 = vunpack.c.l.b16 %v101
    %v331 = vunpack.c.l.b16 %v102
    %v332 = vunpack.c.l.b16 %v103
    %v333 = vunpack.c.l.b16 %v104
    %v334 = vunpack.c.l.b16 %v105
    %v335 = vunpack.c.l.b16 %v106
    %v336 = vunpack.c.l.b16 %v107
    %v337 = vunpack.c.l.b16 %v108
    %v338 = vunpack.c.l.b16 %v109
    %v339 = vunpack.c.l.b16 %v110
    %v340 = vunpack.c.l.b16 %v111
    %v341 = vunpack.c.l.b16 %v112
    %v342 = vunpack.c.l.b16 %v113
    %v343 = vunpack.c.l.b16 %v114
    %v344 = vunpack.c.l.b16 %v115
    %v345 = vunpack.c.l.b16 %v116
    %v346 = vunpack.c.l.b16 %v117
    %v347 = vunpack.c.l.b16 %v118
    %v348 = vunpack.c.l.b16 %v119
    %v349 = vunpack.c.l.b16 %v120
    %v350 = vunpack.c.l.b16 %v121
    %v351 = vunpack.c.l.b16 %v122
    %v352 = vunpack.c.l.b16 %v123
    %v353 = vunpack.c.l.b16 %v124
    %v354 = vunpack.c.l.b16 %v125
    %v355 = vunpack.c.l.b16 %v126
    %v356 = vunpack.c.l.b16 %v127
    %v357 = vunpack.c.l.b16 %v128
    %v358 = vunpack.c.l.b16 %v129
    %v359 = vunpack.c.l.b16 %v130
    %v360 = vunpack.c.l.b16 %v131
    %v361 = vunpack.c.l.b16 %v132
    %v362 = vunpack.c.l.b16 %v133
    %v363 = vunpack.c.l.b16 %v134
    %v364 = vunpack.c.l.b16 %v135
    %v365 = vunpack.c.l.b16 %v136
    %v366 = vunpack.c.l.b16 %v137
    %v367 = vunpack.c.l.b16 %v138
    %v368 = vunpack.c.l.b16 %v139
    %v369 = vunpack.c.l.b16 %v140
    %v370 = vunpack.c.l.b16 %v141
    %v371 = vunpack.c.l.b16 %v142
    %v372 = vunpack.c.l.b16 %v143
    %v373 = vunpack.c.l.b16 %v144
    %v374 = vunpack.c.l.b16 %v145
    %v375 = vpack.c.b16 %v280, %v279
    %v376 = vpack.c.b16 %v282, %v281
    %v377 = vpack.c.b16 %v284, %v283
    %v378 = vpack.c.b16 %v286, %v285
    %v379 = vpack.c.b16 %v288, %v287
    %v380 = vpack.c.b16 %v290, %v289
    %v381 = vpack.c.b16 %v292, %v291
    %v382 = vpack.c.b16 %v294, %v293
    %v383 = vpack.c.b16 %v296, %v295
    %v384 = vpack.c.b16 %v298, %v297
    %v385 = vpack.c.b16 %v300, %v299
    %v386 = vpack.c.b16 %v302, %v301
    %v387 = vpack.c.b16 %v304, %v303
    %v388 = vpack.c.b16 %v306, %v305
    %v389 = vpack.c.b16 %v308, %v307
    %v390 = vpack.c.b16 %v310, %v309
    %v391 = vpack.c.b16 %v312, %v311
    %v392 = vpack.c.b16 %v314, %v313
    %v393 = vpack.c.b16 %v316, %v315
    %v394 = vpack.c.b16 %v318, %v317
    %v395 = vpack.c.b16 %v320, %v319
    %v396 = vpack.c.b16 %v322, %v321
    %v397 = vpack.c.b16 %v324, %v323
    %v398 = vpack.c.b16 %v326, %v325
    %v399 = vpack.c.b16 %v328, %v327
    %v400 = vpack.c.b16 %v330, %v329
    %v401 = vpack.c.b16 %v332, %v331
    %v402 = vpack.c.b16 %v334, %v333
    %v403 = vpack.c.b16 %v336, %v335
    %v404 = vpack.c.b16 %v338, %v337
    %v405 = vpack.c.b16 %v340, %v339
    %v406 = vpack.c.b16 %v342, %v341
    %v407 = vpack.c.b16 %v344, %v343
    %v408 = vpack.c.b16 %v346, %v345
    %v409 = vpack.c.b16 %v348, %v347
    %v410 = vpack.c.b16 %v350, %v349
    %v411 = vpack.c.b16 %v352, %v351
    %v412 = vpack.c.b16 %v354, %v353
    %v413 = vpack.c.b16 %v356, %v355
    %v414 = vpack.c.b16 %v358, %v357
    %v415 = vpack.c.b16 %v360, %v359
    %v416 = vpack.c.b16 %v362, %v361
    %v417 = vpack.c.b16 %v364, %v363
    %v418 = vpack.c.b16 %v366, %v365
    %v419 = vpack.c.b16 %v368, %v367
    %v420 = vpack.c.b16 %v370, %v369
    %v421 = vpack.c.b16 %v372, %v371
    %v422 = vpack.c.b16 %v374, %v373
    %471 = vmatprep.subr.bf16.mxu0 0
    %472 = vmatpush1.bf16.msra.mxu0 %v375
    %473 = vmatprep.subr.bf16.mxu0 0
    %474 = vmatpush1.bf16.msra.mxu0 %v376
    %475 = vmatprep.subr.bf16.mxu0 0
    %476 = vmatpush1.bf16.msra.mxu0 %v377
    %477 = vmatprep.subr.bf16.mxu0 0
    %478 = vmatpush1.bf16.msra.mxu0 %v378
    %479 = vmatprep.subr.bf16.mxu0 0
    %480 = vmatpush1.bf16.msra.mxu0 %v379
    %481 = vmatprep.subr.bf16.mxu0 0
    %482 = vmatpush1.bf16.msra.mxu0 %v380
    %483 = vmatprep.subr.bf16.mxu0 0
    %484 = vmatpush1.bf16.msra.mxu0 %v381
    %485 = vmatprep.subr.bf16.mxu0 0
    %486 = vmatpush1.bf16.msra.mxu0 %v382
    %487 = vmatprep.subr.bf16.mxu0 0
    %488 = vmatpush1.bf16.msra.mxu0 %v383
    %489 = vmatprep.subr.bf16.mxu0 0
    %490 = vmatpush1.bf16.msra.mxu0 %v384
    %491 = vmatprep.subr.bf16.mxu0 0
    %492 = vmatpush1.bf16.msra.mxu0 %v385
    %493 = vmatprep.subr.bf16.mxu0 0
    %494 = vmatpush1.bf16.msra.mxu0 %v386
    %495 = vmatprep.subr.bf16.mxu0 0
    %496 = vmatpush1.bf16.msra.mxu0 %v387
    %497 = vmatprep.subr.bf16.mxu0 0
    %498 = vmatpush1.bf16.msra.mxu0 %v388
    %499 = vmatprep.subr.bf16.mxu0 0
    %500 = vmatpush1.bf16.msra.mxu0 %v389
    %501 = vmatprep.subr.bf16.mxu0 0
    %502 = vmatpush1.bf16.msra.mxu0 %v390
    %503 = vmatprep.mubr.bf16.mxu0 %v172
    %504 = vmatmul.mubr.bf16.gmra.mrb[0].mxu0 %v171
    %v505 = vpop.f32.mrb[0].mxu0
    %v506 = vadd.f32 %v151, %v505
    %v507 = vpop.f32.mrb[0].mxu0
    %v508 = vpop.f32.mrb[0].mxu0
    %v509 = vadd.f32 %v151, %v508
    %v510 = vpop.f32.mrb[0].mxu0
    %511 = vdwg.mxu0
    %512 = vmatprep.subr.bf16.mxu0 0
    %513 = vmatpush1.bf16.msra.mxu0 %v391
    %514 = vmatprep.subr.bf16.mxu0 0
    %515 = vmatpush1.bf16.msra.mxu0 %v392
    %516 = vmatprep.subr.bf16.mxu0 0
    %517 = vmatpush1.bf16.msra.mxu0 %v393
    %518 = vmatprep.subr.bf16.mxu0 0
    %519 = vmatpush1.bf16.msra.mxu0 %v394
    %520 = vmatprep.subr.bf16.mxu0 0
    %521 = vmatpush1.bf16.msra.mxu0 %v395
    %522 = vmatprep.subr.bf16.mxu0 0
    %523 = vmatpush1.bf16.msra.mxu0 %v396
    %524 = vmatprep.subr.bf16.mxu0 0
    %525 = vmatpush1.bf16.msra.mxu0 %v397
    %526 = vmatprep.subr.bf16.mxu0 0
    %527 = vmatpush1.bf16.msra.mxu0 %v398
    %528 = vmatprep.subr.bf16.mxu0 0
    %529 = vmatpush1.bf16.msra.mxu0 %v399
    %530 = vmatprep.subr.bf16.mxu0 0
    %531 = vmatpush1.bf16.msra.mxu0 %v400
    %532 = vmatprep.subr.bf16.mxu0 0
    %533 = vmatpush1.bf16.msra.mxu0 %v401
    %534 = vmatprep.subr.bf16.mxu0 0
    %535 = vmatpush1.bf16.msra.mxu0 %v402
    %536 = vmatprep.subr.bf16.mxu0 0
    %537 = vmatpush1.bf16.msra.mxu0 %v403
    %538 = vmatprep.subr.bf16.mxu0 0
    %539 = vmatpush1.bf16.msra.mxu0 %v404
    %540 = vmatprep.subr.bf16.mxu0 0
    %541 = vmatpush1.bf16.msra.mxu0 %v405
    %542 = vmatprep.subr.bf16.mxu0 0
    %543 = vmatpush1.bf16.msra.mxu0 %v406
    %544 = vmatprep.mubr.bf16.mxu0 %v174
    %545 = vmatmul.mubr.bf16.gmra.mrb[0].mxu0 %v173
    %v546 = vpop.f32.mrb[0].mxu0
    %v547 = vadd.f32 %v506, %v546
    %v548 = vpop.f32.mrb[0].mxu0
    %v549 = vpop.f32.mrb[0].mxu0
    %v550 = vadd.f32 %v509, %v549
    %v551 = vpop.f32.mrb[0].mxu0
    %552 = vdwg.mxu0
    %553 = vmatprep.subr.bf16.mxu0 0
    %554 = vmatpush1.bf16.msra.mxu0 %v407
    %555 = vmatprep.subr.bf16.mxu0 0
    %556 = vmatpush1.bf16.msra.mxu0 %v408
    %557 = vmatprep.subr.bf16.mxu0 0
    %558 = vmatpush1.bf16.msra.mxu0 %v409
    %559 = vmatprep.subr.bf16.mxu0 0
    %560 = vmatpush1.bf16.msra.mxu0 %v410
    %561 = vmatprep.subr.bf16.mxu0 0
    %562 = vmatpush1.bf16.msra.mxu0 %v411
    %563 = vmatprep.subr.bf16.mxu0 0
    %564 = vmatpush1.bf16.msra.mxu0 %v412
    %565 = vmatprep.subr.bf16.mxu0 0
    %566 = vmatpush1.bf16.msra.mxu0 %v413
    %567 = vmatprep.subr.bf16.mxu0 0
    %568 = vmatpush1.bf16.msra.mxu0 %v414
    %569 = vmatprep.subr.bf16.mxu0 0
    %570 = vmatpush1.bf16.msra.mxu0 %v415
    %571 = vmatprep.subr.bf16.mxu0 0
    %572 = vmatpush1.bf16.msra.mxu0 %v416
    %573 = vmatprep.subr.bf16.mxu0 0
    %574 = vmatpush1.bf16.msra.mxu0 %v417
    %575 = vmatprep.subr.bf16.mxu0 0
    %576 = vmatpush1.bf16.msra.mxu0 %v418
    %577 = vmatprep.subr.bf16.mxu0 0
    %578 = vmatpush1.bf16.msra.mxu0 %v419
    %579 = vmatprep.subr.bf16.mxu0 0
    %580 = vmatpush1.bf16.msra.mxu0 %v420
    %581 = vmatprep.subr.bf16.mxu0 0
    %582 = vmatpush1.bf16.msra.mxu0 %v421
    %583 = vmatprep.subr.bf16.mxu0 0
    %584 = vmatpush1.bf16.msra.mxu0 %v422
    %585 = vmatprep.mubr.bf16.mxu0 %v176
    %586 = vmatmul.mubr.bf16.gmra.mrb[0].mxu0 %v175
    %v587 = vpop.f32.mrb[0].mxu0
    %v588 = vadd.f32 %v547, %v587
    %v589 = vpop.f32.mrb[0].mxu0
    %v590 = vpop.f32.mrb[0].mxu0
    %v591 = vadd.f32 %v550, %v590
    %v592 = vpop.f32.mrb[0].mxu0
    %593 = vdwg.mxu0
    %594 = vst [vmem:[#allocation7] sm:$0xff] %v588
    %595 = vst [vmem:[#allocation7 + $0x8] sm:$0xff] %v591
    // Predicated region
    $region22: #{tpu_custom_call.1} parent=1 // pred_check
      _
    $region23: #{tpu_custom_call.1} parent=1 // pred_check_branch
      %597 = sbr.rel (0) target = $region25
    $region24: #{tpu_custom_call.1} parent=1 // pred_region
      %s599 = ssub.s32 256, 256
      %600 = vsyncadd [#allocation4], %s599
      %s601 = sshll.u32 [#allocation7], 4
      %s602 = int_to_ptr.vmem [resolvable:$true] %s601
      %607 = dma.vmem_to_hbm [thread:$0]  %s602, 256, %s3, [#allocation4], 128, 128, 8
    $region25: #{tpu_custom_call.1} parent=1 // pred_fallthru
      _
    // Predicated region
    $region26: #{tpu_custom_call.1} parent=1 // pred_check
      _
    $region27: #{tpu_custom_call.1} parent=1 // pred_check_branch
      %609 = sbr.rel (0) target = $region29
    $region28: #{tpu_custom_call.1} parent=1 // pred_region
      %610 = dma.done [#allocation4], 256
    $region29: #{tpu_custom_call.1} parent=1 // pred_fallthru
      _
    %611 = vsyncpa [#allocation3], 1
    %612 = vsyncpa [#allocation6], 1
    %613 = vsyncpa [#allocation4], 1

</llo_original>
